<compile_context>
chip_gen: v7x
topology: tpu7x:2x2x1
jax: 0.10.0
libtpu: 0.0.40
codegen_flags: <defaults>
</compile_context>

<pallas_src>
import functools
import math

import jax
import jax.numpy as jnp
from jax.experimental import pallas as pl
from jax.experimental.pallas import tpu as pltpu


def _round_up(x, m):
    return ((x + m - 1) // m) * m


def subnet_kernel(x_ref, w1_ref, b1_ref, w2_ref, b2_ref, o_ref):
    """One batch block: y = tanh(tanh(x @ W1 + b1) @ W2 + b2)."""
    # Cast x in-register to the MXU/weight dtype (no-op on the pure f32 path).
    x = x_ref[...].astype(w1_ref.dtype)
    # Layer 1: Linear -> Tanh (Dropout = identity in eval mode).
    h1 = jnp.dot(x, w1_ref[...], preferred_element_type=jnp.float32)
    h1 = jnp.tanh(h1 + b1_ref[...])
    # Layer 2: Linear -> Tanh; MXU accumulation stays f32.
    h2 = jnp.dot(h1.astype(w2_ref.dtype), w2_ref[...],
                 preferred_element_type=jnp.float32)
    h2 = jnp.tanh(h2 + b2_ref[...])
    o_ref[...] = h2.astype(o_ref.dtype)


@functools.partial(jax.jit, static_argnames=("block_b", "compute_dtype"))
def subnet_forward(x, w1, b1, w2, b2, *, block_b=None, compute_dtype=None):
    """x: [B, in], w1: [in, hidden], b1: [1, hidden], w2: [hidden, hidden], b2: [1, hidden].

    compute_dtype sets the MXU/weight dtype (e.g. jnp.bfloat16 for the fast
    path); accumulation is always f32.  Defaults to x.dtype for strict parity
    with the PyTorch module.
    """
    B, in_size = x.shape
    hidden = w1.shape[1]

    if compute_dtype is None:
        compute_dtype = x.dtype
    w_dtype = jnp.dtype(compute_dtype)
    x_bytes = jnp.dtype(x.dtype).itemsize
    o_bytes = x_bytes                        # output written in x.dtype
    w_bytes = w_dtype.itemsize

    # Fixed VMEM cost (weights + biases, double-buffered worst case) and the
    # per-row cost of the batch-scaled buffers (x, out, f32 intermediates).
    weight_fixed = 2 * (in_size * hidden + hidden * hidden) * w_bytes + 4 * hidden * 4
    per_row = 2 * in_size * x_bytes + 2 * hidden * o_bytes + 3 * hidden * 4

    if block_b is None:
        budget = 32 << 20                                      # VMEM working budget
        cap = max((budget - weight_fixed) // max(per_row, 1), 8)
        cap = max(8, min(int(cap) // 8 * 8, 8192))
        if B > cap:
            block_b = cap                                      # multiple of 8
        elif B >= 1024:
            # Keep >= 2 grid steps so both v7x TensorCores get work.
            block_b = _round_up(pl.cdiv(B, 2), 8)
        else:
            block_b = B                                        # full dim -> always legal
    block_b = int(block_b)
    if block_b != B:
        block_b = max(8, _round_up(block_b, 8))                # (8, x) layout rule

    grid = (pl.cdiv(B, block_b),)

    # Weights are cast once in the wrapper (tiny, not batch-scaled); biases
    # stay f32 since they are added to the f32 accumulator.  x is NOT cast
    # here -- the kernel casts it in-register.
    w1c = w1.astype(w_dtype)
    w2c = w2.astype(w_dtype)
    b1f = b1.reshape(1, hidden).astype(jnp.float32)
    b2f = b2.reshape(1, hidden).astype(jnp.float32)

    # Explicit VMEM budget from the actual block footprint; cap at 48 MiB to
    # leave compiler scratch headroom on v7x (64 MiB physical).
    vmem_need = weight_fixed + block_b * per_row
    vmem_limit = int(min(max(int(vmem_need * 1.5) + (4 << 20), 32 << 20), 48 << 20))

    return pl.pallas_call(
        subnet_kernel,
        out_shape=jax.ShapeDtypeStruct((B, hidden), x.dtype),
        grid_spec=pltpu.PrefetchScalarGridSpec(
            num_scalar_prefetch=0,
            grid=grid,
            in_specs=[
                pl.BlockSpec((block_b, in_size), lambda i: (i, 0)),
                pl.BlockSpec((in_size, hidden), lambda i: (0, 0)),
                pl.BlockSpec((1, hidden), lambda i: (0, 0)),
                pl.BlockSpec((hidden, hidden), lambda i: (0, 0)),
                pl.BlockSpec((1, hidden), lambda i: (0, 0)),
            ],
            out_specs=pl.BlockSpec((block_b, hidden), lambda i: (i, 0)),
        ),
        compiler_params=pltpu.CompilerParams(
            dimension_semantics=("parallel",),
            vmem_limit_bytes=vmem_limit,
        ),
    )(x, w1c, b1f, w2c, b2f)


def init_linear_params(key, in_features, out_features, dtype=jnp.float32):
    """Mimics nn.Linear init: uniform(-1/sqrt(in), 1/sqrt(in)).

    Weight is returned pre-transposed as [in, out] so the kernel computes x @ W.
    """
    k_w, k_b = jax.random.split(key)
    bound = 1.0 / math.sqrt(in_features)
    w = jax.random.uniform(k_w, (in_features, out_features), dtype,
                           minval=-bound, maxval=bound)
    b = jax.random.uniform(k_b, (1, out_features), dtype,
                           minval=-bound, maxval=bound)
    return w, b


def reference_forward(x, w1, b1, w2, b2):
    hi = jax.lax.Precision.HIGHEST
    h1 = jnp.tanh(jnp.dot(x, w1, precision=hi) + b1)
    return jnp.tanh(jnp.dot(h1, w2, precision=hi) + b2)


if __name__ == "__main__":
    # Shapes consistent with the module: batch=8, in_size=16, hidden=32.
    batch, in_size, hidden_size = 8, 16, 32
    key = jax.random.PRNGKey(0)
    kx, k1, k2, kb = jax.random.split(key, 4)

    x = jax.random.normal(kx, (batch, in_size), jnp.float32)
    w1, b1 = init_linear_params(k1, in_size, hidden_size)
    w2, b2 = init_linear_params(k2, hidden_size, hidden_size)

    y_ref = reference_forward(x, w1, b1, w2, b2)

    # f32 path at the module's native (small) shapes.
    y = jax.block_until_ready(subnet_forward(x, w1, b1, w2, b2))
    assert y.shape == (batch, hidden_size)
    assert y.dtype == x.dtype
    assert jnp.allclose(y, y_ref, atol=2e-3, rtol=2e-3), \
        float(jnp.max(jnp.abs(y - y_ref)))

    # bf16 weight/MXU path (fast path on v5e/v6e/v7x), f32 accumulation.
    y_bf16 = jax.block_until_ready(
        subnet_forward(x, w1, b1, w2, b2, compute_dtype=jnp.bfloat16))
    assert jnp.allclose(y_bf16, y_ref, atol=6e-2, rtol=6e-2)

    # Multi-step grid + ragged batch (exercises ragged masking + pipelining).
    x_big = jax.random.normal(kb, (300, in_size), jnp.float32)
    y_big = jax.block_until_ready(
        subnet_forward(x_big, w1, b1, w2, b2, block_b=128))
    y_big_ref = reference_forward(x_big, w1, b1, w2, b2)
    assert y_big.shape == (300, hidden_size)
    assert jnp.allclose(y_big, y_big_ref, atol=2e-3, rtol=2e-3), \
        float(jnp.max(jnp.abs(y_big - y_big_ref)))

    print("KERNEL_OK")
</pallas_src>

<mosaic_0001>
module attributes {stable_mosaic.version = 11 : i64} {
  func.func @subnet_kernel(%arg0: i32, %arg1: memref<8x16xf32, #tpu.memory_space<vmem>>, %arg2: memref<16x32xf32, #tpu.memory_space<vmem>>, %arg3: memref<1x32xf32, #tpu.memory_space<vmem>>, %arg4: memref<32x32xf32, #tpu.memory_space<vmem>>, %arg5: memref<1x32xf32, #tpu.memory_space<vmem>>, %arg6: memref<8x32xf32, #tpu.memory_space<vmem>>) attributes {dimension_semantics = [#tpu.dimension_semantics<parallel>], iteration_bounds = array<i64: 1>, scalar_prefetch = 0 : i64, scratch_operands = 0 : i64, tpu.core_type = #tpu.core_type<tc>, window_params = [{transform_indices = @transform_0, window_bounds = array<i64: 8, 16>}, {pipeline_mode = #tpu.pipeline_mode<synchronous>, transform_indices = @transform_1, window_bounds = array<i64: 16, 32>}, {pipeline_mode = #tpu.pipeline_mode<synchronous>, transform_indices = @transform_2, window_bounds = array<i64: 1, 32>}, {pipeline_mode = #tpu.pipeline_mode<synchronous>, transform_indices = @transform_3, window_bounds = array<i64: 32, 32>}, {pipeline_mode = #tpu.pipeline_mode<synchronous>, transform_indices = @transform_4, window_bounds = array<i64: 1, 32>}, {transform_indices = @transform_5, window_bounds = array<i64: 8, 32>}]} {
    %c0 = arith.constant 0 : index
    %c0_0 = arith.constant 0 : index
    %0 = vector.load %arg1[%c0, %c0_0] : memref<8x16xf32, #tpu.memory_space<vmem>>, vector<8x16xf32>
    %c0_1 = arith.constant 0 : index
    %c0_2 = arith.constant 0 : index
    %1 = vector.load %arg2[%c0_1, %c0_2] : memref<16x32xf32, #tpu.memory_space<vmem>>, vector<16x32xf32>
    %cst = arith.constant dense<0.000000e+00> : vector<8x32xf32>
    %2 = tpu.matmul %0, %1, %cst {dimension_numbers = #tpu.dot_dimension_numbers<[1], [0], [0], [1], [0, 0, 1, 1], [], []>} : vector<8x16xf32>, vector<16x32xf32>, vector<8x32xf32> -> vector<8x32xf32>
    %c0_3 = arith.constant 0 : index
    %c0_4 = arith.constant 0 : index
    %3 = vector.load %arg3[%c0_3, %c0_4] : memref<1x32xf32, #tpu.memory_space<vmem>>, vector<1x32xf32>
    %4 = vector.broadcast %3 : vector<1x32xf32> to vector<8x32xf32>
    %5 = arith.addf %2, %4 : vector<8x32xf32>
    %6 = math.tanh %5 : vector<8x32xf32>
    %c0_5 = arith.constant 0 : index
    %c0_6 = arith.constant 0 : index
    %7 = vector.load %arg4[%c0_5, %c0_6] : memref<32x32xf32, #tpu.memory_space<vmem>>, vector<32x32xf32>
    %cst_7 = arith.constant dense<0.000000e+00> : vector<8x32xf32>
    %8 = tpu.matmul %6, %7, %cst_7 {dimension_numbers = #tpu.dot_dimension_numbers<[1], [0], [0], [1], [0, 0, 1, 1], [], []>} : vector<8x32xf32>, vector<32x32xf32>, vector<8x32xf32> -> vector<8x32xf32>
    %c0_8 = arith.constant 0 : index
    %c0_9 = arith.constant 0 : index
    %9 = vector.load %arg5[%c0_8, %c0_9] : memref<1x32xf32, #tpu.memory_space<vmem>>, vector<1x32xf32>
    %10 = vector.broadcast %9 : vector<1x32xf32> to vector<8x32xf32>
    %11 = arith.addf %8, %10 : vector<8x32xf32>
    %12 = math.tanh %11 : vector<8x32xf32>
    %c0_10 = arith.constant 0 : index
    %c0_11 = arith.constant 0 : index
    %13 = vector.load %arg6[%c0_10, %c0_11] : memref<8x32xf32, #tpu.memory_space<vmem>>, vector<8x32xf32>
    tpu.vector_store %arg6[%c0_10, %c0_11], %12 {strides = array<i32>} : memref<8x32xf32, #tpu.memory_space<vmem>>, vector<8x32xf32>,
    return
  }
  func.func @transform_0(%arg0: i32) -> (i32, i32) {
    %c0_i32 = arith.constant 0 : i32
    %c0_i32_0 = arith.constant 0 : i32
    return %arg0, %c0_i32 : i32, i32
  }
  func.func @transform_1(%arg0: i32) -> (i32, i32) {
    %c0_i32 = arith.constant 0 : i32
    %c0_i32_0 = arith.constant 0 : i32
    %c0_i32_1 = arith.constant 0 : i32
    return %c0_i32, %c0_i32_0 : i32, i32
  }
  func.func @transform_2(%arg0: i32) -> (i32, i32) {
    %c0_i32 = arith.constant 0 : i32
    %c0_i32_0 = arith.constant 0 : i32
    %c0_i32_1 = arith.constant 0 : i32
    return %c0_i32, %c0_i32_0 : i32, i32
  }
  func.func @transform_3(%arg0: i32) -> (i32, i32) {
    %c0_i32 = arith.constant 0 : i32
    %c0_i32_0 = arith.constant 0 : i32
    %c0_i32_1 = arith.constant 0 : i32
    return %c0_i32, %c0_i32_0 : i32, i32
  }
  func.func @transform_4(%arg0: i32) -> (i32, i32) {
    %c0_i32 = arith.constant 0 : i32
    %c0_i32_0 = arith.constant 0 : i32
    %c0_i32_1 = arith.constant 0 : i32
    return %c0_i32, %c0_i32_0 : i32, i32
  }
  func.func @transform_5(%arg0: i32) -> (i32, i32) {
    %c0_i32 = arith.constant 0 : i32
    %c0_i32_0 = arith.constant 0 : i32
    return %arg0, %c0_i32 : i32, i32
  }
}

</mosaic_0001>

<llo_original>
// kernel: subnet_forward.1
$region0: #{subnet_forward.1}
  #allocation0 [shape = 'u32[]', space=smem, size = 0x4, offset = 0x4, fixed_abs, tag = 'smem constant byte address 0x4 - core index']
  #allocation1 [shape = 'u32[144,128]{1,0:T(1,128)}', space=vmem, size = 0x12000, scoped, tag = 'internal scratch']
  %s0 = inlined_call_operand.hbm [shape: f32[8,16], index: 0, kind: input, shape index: {}]
  %s1 = inlined_call_operand.hbm [shape: f32[16,32], index: 1, kind: input, shape index: {}]
  %s2 = inlined_call_operand.vmem [shape: f32[1,32], index: 2, kind: input, shape index: {}]
  %s3 = inlined_call_operand.hbm [shape: f32[32,32], index: 3, kind: input, shape index: {}]
  %s4 = inlined_call_operand.vmem [shape: f32[1,32], index: 4, kind: input, shape index: {}]
  %s5 = inlined_call_operand.hbm [shape: f32[8,32], index: 5, kind: output, shape index: {}]
  %s6 = sld [smem:[#allocation0]]
  $region42: #{subnet_forward.1} parent=0
    _
  %s8 = ssub.s32 1, %s6
  %s9 = scalar_select 0, %s8, %s6
  $region1: #{subnet_forward.1} parent=0
    #allocation2 [shape = 'u8[4096]{0}', space=vmem, size = 0x1000, scoped, tag = 'input window, operand 0, single buffered']
    #allocation3 [shape = 's32[1]{0}', space=sflag, size = 0x4, scoped, tag = 'scoped memory for subnet_forward.1']
    #allocation4 [shape = 's32[1]{0}', space=sflag, size = 0x4, scoped, tag = 'scoped memory for subnet_forward.1']
    #allocation5 [shape = 'u8[8192]{0}', space=vmem, size = 0x2000, scoped, tag = 'input window, operand 1, single buffered']
    #allocation6 [shape = 's32[1]{0}', space=sflag, size = 0x4, scoped, tag = 'scoped memory for subnet_forward.1']
    #allocation7 [shape = 'u8[16384]{0}', space=vmem, size = 0x4000, scoped, tag = 'input window, operand 3, single buffered']
    #allocation8 [shape = 'u8[4096]{0}', space=vmem, size = 0x1000, scoped, tag = 'output window, operand 0, single buffered']
    %10 = vsyncpa [#allocation3], 0
    %11 = vsyncpa [#allocation6], 0
    %12 = vsyncpa [#allocation4], 0
    // Predicated region
    $region2: #{subnet_forward.1} parent=1 // pred_check
      _
    $region3: #{subnet_forward.1} parent=1 // pred_check_branch
      %14 = sbr.rel (0) target = $region5
    $region4: #{subnet_forward.1} parent=1 // pred_region
      %s16 = ssub.s32 128, 128
      %17 = vsyncadd [#allocation3], %s16
      %s19 = sshll.u32 [#allocation2], 4
      %s20 = int_to_ptr.vmem [resolvable:$true] %s19
      %22 = dma.hbm_to_vmem [thread:$0]  %s0, 128, %s20, [#allocation3]
    $region5: #{subnet_forward.1} parent=1 // pred_fallthru
      _
    // Predicated region
    $region6: #{subnet_forward.1} parent=1 // pred_check
      _
    $region7: #{subnet_forward.1} parent=1 // pred_check_branch
      %24 = sbr.rel (0) target = $region9
    $region8: #{subnet_forward.1} parent=1 // pred_region
      %s26 = ssub.s32 256, 256
      %27 = vsyncadd [#allocation6], %s26
      %s28 = sshll.u32 [#allocation5], 4
      %s29 = int_to_ptr.vmem [resolvable:$true] %s28
      %34 = dma.hbm_to_vmem [thread:$0]  %s1, 256, %s29, [#allocation6], 128, 128, 8
    $region9: #{subnet_forward.1} parent=1 // pred_fallthru
      _
    // Predicated region
    $region10: #{subnet_forward.1} parent=1 // pred_check
      _
    $region11: #{subnet_forward.1} parent=1 // pred_check_branch
      %36 = sbr.rel (0) target = $region13
    $region12: #{subnet_forward.1} parent=1 // pred_region
      _
    $region13: #{subnet_forward.1} parent=1 // pred_fallthru
      _
    // Predicated region
    $region14: #{subnet_forward.1} parent=1 // pred_check
      _
    $region15: #{subnet_forward.1} parent=1 // pred_check_branch
      %38 = sbr.rel (0) target = $region17
    $region16: #{subnet_forward.1} parent=1 // pred_region
      %s40 = ssub.s32 512, 512
      %41 = vsyncadd [#allocation6], %s40
      %s42 = sshll.u32 [#allocation7], 4
      %s43 = int_to_ptr.vmem [resolvable:$true] %s42
      %48 = dma.hbm_to_vmem [thread:$0]  %s3, 512, %s43, [#allocation6], 128, 128, 8
    $region17: #{subnet_forward.1} parent=1 // pred_fallthru
      _
    // Predicated region
    $region18: #{subnet_forward.1} parent=1 // pred_check
      _
    $region19: #{subnet_forward.1} parent=1 // pred_check_branch
      %50 = sbr.rel (0) target = $region21
    $region20: #{subnet_forward.1} parent=1 // pred_region
      _
    $region21: #{subnet_forward.1} parent=1 // pred_fallthru
      _
    // Predicated region
    $region22: #{subnet_forward.1} parent=1 // pred_check
      _
    $region23: #{subnet_forward.1} parent=1 // pred_check_branch
      %52 = sbr.rel (0) target = $region25
    $region24: #{subnet_forward.1} parent=1 // pred_region
      %53 = dma.done [#allocation3], 128
    $region25: #{subnet_forward.1} parent=1 // pred_fallthru
      _
    // Predicated region
    $region26: #{subnet_forward.1} parent=1 // pred_check
      _
    $region27: #{subnet_forward.1} parent=1 // pred_check_branch
      %55 = sbr.rel (0) target = $region29
    $region28: #{subnet_forward.1} parent=1 // pred_region
      %56 = dma.done [#allocation6], 256
    $region29: #{subnet_forward.1} parent=1 // pred_fallthru
      _
    // Predicated region
    $region30: #{subnet_forward.1} parent=1 // pred_check
      _
    $region31: #{subnet_forward.1} parent=1 // pred_check_branch
      %58 = sbr.rel (0) target = $region33
    $region32: #{subnet_forward.1} parent=1 // pred_region
      %59 = dma.done [#allocation6], 512
    $region33: #{subnet_forward.1} parent=1 // pred_fallthru
      _
    %v60 = vld [vmem:[#allocation2] sm:$0xff]
    %v61 = vld [vmem:[#allocation5] sm:$0xff]
    %v62 = vld [vmem:[#allocation5 + $0x8] sm:$0xff]
    %v63 = vld [vmem:[%s2] sm:$0x1]
    %v65 = vlaneseq
    %v66 = vshrl.u32 %v65, 7
    %v67 = vsub.s32 0, %v66
    %v68 = vrot.slane %v63, %v67
    %vm70 = vcmask 130048
    %v72 = vsel %vm70, %v60, 0
    %74 = vmatprep.subr.mxu0 0.0
    %75 = vmatpush1.msra.mxu0 %v61
    %76 = vmatprep.subr.mxu0 0.0
    %77 = vmatpush1.msra.mxu0 %v62
    %78 = vmatprep.subr.mxu0 0.0
    %79 = vmatpush1.msra.mxu0 0.0
    %80 = vmatprep.subr.mxu0 0.0
    %81 = vmatpush1.msra.mxu0 0.0
    %82 = vmatprep.subr.mxu0 0.0
    %83 = vmatpush1.msra.mxu0 0.0
    %84 = vmatprep.subr.mxu0 0.0
    %85 = vmatpush1.msra.mxu0 0.0
    %86 = vmatprep.subr.mxu0 0.0
    %87 = vmatpush1.msra.mxu0 0.0
    %88 = vmatprep.subr.mxu0 0.0
    %89 = vmatpush1.msra.mxu0 0.0
    %90 = vmatprep.subr.mxu0 0.0
    %91 = vmatpush1.msra.mxu0 0.0
    %92 = vmatprep.subr.mxu0 0.0
    %93 = vmatpush1.msra.mxu0 0.0
    %94 = vmatprep.subr.mxu0 0.0
    %95 = vmatpush1.msra.mxu0 0.0
    %96 = vmatprep.subr.mxu0 0.0
    %97 = vmatpush1.msra.mxu0 0.0
    %98 = vmatprep.subr.mxu0 0.0
    %99 = vmatpush1.msra.mxu0 0.0
    %100 = vmatprep.subr.mxu0 0.0
    %101 = vmatpush1.msra.mxu0 0.0
    %102 = vmatprep.subr.mxu0 0.0
    %103 = vmatpush1.msra.mxu0 0.0
    %104 = vmatprep.subr.mxu0 0.0
    %105 = vmatpush1.msra.mxu0 0.0
    %106 = vmatprep.subr.mxu0 0.0
    %107 = vmatpush1.msra.mxu0 0.0
    %108 = vmatprep.subr.mxu0 0.0
    %109 = vmatpush1.msra.mxu0 0.0
    %110 = vmatprep.subr.mxu0 0.0
    %111 = vmatpush1.msra.mxu0 0.0
    %112 = vmatprep.subr.mxu0 0.0
    %113 = vmatpush1.msra.mxu0 0.0
    %114 = vmatprep.subr.mxu0 0.0
    %115 = vmatpush1.msra.mxu0 0.0
    %116 = vmatprep.subr.mxu0 0.0
    %117 = vmatpush1.msra.mxu0 0.0
    %118 = vmatprep.subr.mxu0 0.0
    %119 = vmatpush1.msra.mxu0 0.0
    %120 = vmatprep.subr.mxu0 0.0
    %121 = vmatpush1.msra.mxu0 0.0
    %122 = vmatprep.subr.mxu0 0.0
    %123 = vmatpush1.msra.mxu0 0.0
    %124 = vmatprep.subr.mxu0 0.0
    %125 = vmatpush1.msra.mxu0 0.0
    %126 = vmatprep.subr.mxu0 0.0
    %127 = vmatpush1.msra.mxu0 0.0
    %128 = vmatprep.subr.mxu0 0.0
    %129 = vmatpush1.msra.mxu0 0.0
    %130 = vmatprep.subr.mxu0 0.0
    %131 = vmatpush1.msra.mxu0 0.0
    %132 = vmatprep.subr.mxu0 0.0
    %133 = vmatpush1.msra.mxu0 0.0
    %134 = vmatprep.subr.mxu0 0.0
    %135 = vmatpush1.msra.mxu0 0.0
    %136 = vmatprep.subr.mxu0 0.0
    %137 = vmatpush1.msra.mxu0 0.0
    %138 = vmatprep.mubr.f32.mxu0 0.0
    %139 = vmatmul.mubr.f32.gmra.mrb[0].mxu0 %v72
    %v140 = vpop.f32.mrb[0].mxu0
    %v141 = vadd.f32 %v68, %v140
    %v142 = vpop.f32.mrb[0].mxu0
    %143 = vdwg.mxu0
    %v144 = vtanh.pop %v141
    %v145 = vld [vmem:[#allocation7] sm:$0xff]
    %v146 = vld [vmem:[#allocation7 + $0x8] sm:$0xff]
    %v147 = vld [vmem:[#allocation7 + $0x10] sm:$0xff]
    %v148 = vld [vmem:[#allocation7 + $0x18] sm:$0xff]
    %v149 = vld [vmem:[%s4] sm:$0x1]
    %v151 = vlaneseq
    %v152 = vshrl.u32 %v151, 7
    %v153 = vsub.s32 0, %v152
    %v154 = vrot.slane %v149, %v153
    %vm156 = vcmask 261120
    %v158 = vsel %vm156, %v144, 0
    %160 = vmatprep.subr.mxu0 0.0
    %161 = vmatpush1.msra.mxu0 %v145
    %162 = vmatprep.subr.mxu0 0.0
    %163 = vmatpush1.msra.mxu0 %v146
    %164 = vmatprep.subr.mxu0 0.0
    %165 = vmatpush1.msra.mxu0 %v147
    %166 = vmatprep.subr.mxu0 0.0
    %167 = vmatpush1.msra.mxu0 %v148
    %168 = vmatprep.subr.mxu0 0.0
    %169 = vmatpush1.msra.mxu0 0.0
    %170 = vmatprep.subr.mxu0 0.0
    %171 = vmatpush1.msra.mxu0 0.0
    %172 = vmatprep.subr.mxu0 0.0
    %173 = vmatpush1.msra.mxu0 0.0
    %174 = vmatprep.subr.mxu0 0.0
    %175 = vmatpush1.msra.mxu0 0.0
    %176 = vmatprep.subr.mxu0 0.0
    %177 = vmatpush1.msra.mxu0 0.0
    %178 = vmatprep.subr.mxu0 0.0
    %179 = vmatpush1.msra.mxu0 0.0
    %180 = vmatprep.subr.mxu0 0.0
    %181 = vmatpush1.msra.mxu0 0.0
    %182 = vmatprep.subr.mxu0 0.0
    %183 = vmatpush1.msra.mxu0 0.0
    %184 = vmatprep.subr.mxu0 0.0
    %185 = vmatpush1.msra.mxu0 0.0
    %186 = vmatprep.subr.mxu0 0.0
    %187 = vmatpush1.msra.mxu0 0.0
    %188 = vmatprep.subr.mxu0 0.0
    %189 = vmatpush1.msra.mxu0 0.0
    %190 = vmatprep.subr.mxu0 0.0
    %191 = vmatpush1.msra.mxu0 0.0
    %192 = vmatprep.subr.mxu0 0.0
    %193 = vmatpush1.msra.mxu0 0.0
    %194 = vmatprep.subr.mxu0 0.0
    %195 = vmatpush1.msra.mxu0 0.0
    %196 = vmatprep.subr.mxu0 0.0
    %197 = vmatpush1.msra.mxu0 0.0
    %198 = vmatprep.subr.mxu0 0.0
    %199 = vmatpush1.msra.mxu0 0.0
    %200 = vmatprep.subr.mxu0 0.0
    %201 = vmatpush1.msra.mxu0 0.0
    %202 = vmatprep.subr.mxu0 0.0
    %203 = vmatpush1.msra.mxu0 0.0
    %204 = vmatprep.subr.mxu0 0.0
    %205 = vmatpush1.msra.mxu0 0.0
    %206 = vmatprep.subr.mxu0 0.0
    %207 = vmatpush1.msra.mxu0 0.0
    %208 = vmatprep.subr.mxu0 0.0
    %209 = vmatpush1.msra.mxu0 0.0
    %210 = vmatprep.subr.mxu0 0.0
    %211 = vmatpush1.msra.mxu0 0.0
    %212 = vmatprep.subr.mxu0 0.0
    %213 = vmatpush1.msra.mxu0 0.0
    %214 = vmatprep.subr.mxu0 0.0
    %215 = vmatpush1.msra.mxu0 0.0
    %216 = vmatprep.subr.mxu0 0.0
    %217 = vmatpush1.msra.mxu0 0.0
    %218 = vmatprep.subr.mxu0 0.0
    %219 = vmatpush1.msra.mxu0 0.0
    %220 = vmatprep.subr.mxu0 0.0
    %221 = vmatpush1.msra.mxu0 0.0
    %222 = vmatprep.subr.mxu0 0.0
    %223 = vmatpush1.msra.mxu0 0.0
    %224 = vmatprep.mubr.f32.mxu0 0.0
    %225 = vmatmul.mubr.f32.gmra.mrb[0].mxu0 %v158
    %v226 = vpop.f32.mrb[0].mxu0
    %v227 = vadd.f32 %v154, %v226
    %v228 = vpop.f32.mrb[0].mxu0
    %229 = vdwg.mxu0
    %v230 = vtanh.pop %v227
    %231 = vst.msk [vmem:[#allocation8] sm:$0xff] %vm156, %v230
    // Predicated region
    $region34: #{subnet_forward.1} parent=1 // pred_check
      _
    $region35: #{subnet_forward.1} parent=1 // pred_check_branch
      %233 = sbr.rel (0) target = $region37
    $region36: #{subnet_forward.1} parent=1 // pred_region
      %s235 = ssub.s32 128, 128
      %236 = vsyncadd [#allocation4], %s235
      %s238 = sshll.u32 [#allocation8], 4
      %s239 = int_to_ptr.vmem [resolvable:$true] %s238
      %241 = dma.vmem_to_hbm [thread:$0]  %s239, 128, %s5, [#allocation4]
    $region37: #{subnet_forward.1} parent=1 // pred_fallthru
      _
    // Predicated region
    $region38: #{subnet_forward.1} parent=1 // pred_check
      _
    $region39: #{subnet_forward.1} parent=1 // pred_check_branch
      %243 = sbr.rel (0) target = $region41
    $region40: #{subnet_forward.1} parent=1 // pred_region
      %244 = dma.done [#allocation4], 128
    $region41: #{subnet_forward.1} parent=1 // pred_fallthru
      _
    %245 = vsyncpa [#allocation3], 1
    %246 = vsyncpa [#allocation6], 1
    %247 = vsyncpa [#allocation4], 1

</llo_original>
